<compile_context>
chip_gen: v7x
topology: tpu7x:2x2x1
jax: 0.10.0
libtpu: 0.0.40
codegen_flags: <defaults>
</compile_context>

<pallas_src>
import functools

import numpy as np
import jax
import jax.numpy as jnp
from jax.experimental import pallas as pl
from jax.experimental.pallas import tpu as pltpu

_INV_SQRT2 = 0.7071067811865476
_LANE = 128


def _gelu_exact(x):
    # matches torch.nn.functional.gelu(approximate='none')
    return 0.5 * x * (1.0 + jax.lax.erf(x * _INV_SQRT2))


def _round_up(a, b):
    return (a + b - 1) // b * b


# ----------------------------------------------------------------------------
# Fused kernel: one (batch, time-tile) grid point computes
#   out_tile = FSConv2(gelu(FSConv1(gelu(x_tile+halo)))) + residual_tile
# ----------------------------------------------------------------------------
def _fsconv_block_kernel(xa_ref, xb_ref, w1_ref, b1_ref, w2_ref, b2_ref, *rest,
                         K, dilation, pad, tile_t, seq_len, has_projector):
    if has_projector:
        wp_ref, bp_ref, out_ref = rest
    else:
        (out_ref,) = rest

    TT = tile_t
    TH = TT + (K - 1) * dilation          # h1 rows needed: tile + layer-2 halo

    # Two adjacent TT-blocks of the zero-padded input -> window of size 2*TT
    # covering [tile_start - 2*pad, tile_start + TT + 2*halo_hi) in fp32.
    xwin = jnp.concatenate([xa_ref[0], xb_ref[0]], axis=0)        # (2*TT, Cin_p)

    # ---- residual path (raw x rows of this tile, kept fp32 for accuracy) -----
    xres = xwin[2 * pad: 2 * pad + TT, :]                         # (TT, Cin_p)
    if has_projector:
        residual = jnp.dot(xres, wp_ref[...],
                           preferred_element_type=jnp.float32) + bp_ref[...]
    else:
        residual = xres                                           # Cin_p == Cout_p

    # ---- layer 1: gelu -> dilated conv, K taps fused into one K*Cin matmul ---
    xg = _gelu_exact(xwin).astype(jnp.bfloat16)
    x_stack = jnp.concatenate(
        [xg[k * dilation: k * dilation + TH, :] for k in range(K)], axis=1)
    h1 = jnp.dot(x_stack, w1_ref[...],
                 preferred_element_type=jnp.float32) + b1_ref[...]   # (TH, Cout_p)

    # ---- layer 2: gelu(h1) with "same"-padding zeros outside [0, T) ----------
    hg = _gelu_exact(h1)
    s = (pl.program_id(1) * TT - pad) + jax.lax.broadcasted_iota(
        jnp.int32, (TH, 1), 0)                                    # global positions
    hg = jnp.where((s >= 0) & (s < seq_len), hg, 0.0).astype(jnp.bfloat16)
    h_stack = jnp.concatenate(
        [hg[k * dilation: k * dilation + TT, :] for k in range(K)], axis=1)
    out = jnp.dot(h_stack, w2_ref[...],
                  preferred_element_type=jnp.float32) + b2_ref[...]  # (TT, Cout_p)

    out_ref[0] = (out + residual).astype(out_ref.dtype)


# ----------------------------------------------------------------------------
# FSConvBlock forward: layout plumbing + parameter folding + one pallas_call
# ----------------------------------------------------------------------------
def fsconv_block_forward(x_ncw, params, kernel_size, dilation, *, tile_t=None):
    """x_ncw: (B, C_in, T) as in PyTorch Conv1d.  Returns (B, C_out, T)."""
    B, C_in, T = x_ncw.shape
    C_out = params["w1"].shape[0]
    K = kernel_size
    rf = (K - 1) * dilation + 1
    pad = rf // 2
    has_projector = params["proj_w"] is not None
    assert has_projector or C_in == C_out

    # lane-dense channel padding (multiples of 128)
    cin_p = _round_up(C_in, _LANE)
    cout_p = _round_up(C_out, _LANE)

    # time tile: multiple of 8 sublanes, >= 2*(rf-1) so a 2-block window covers
    # the halo of both conv layers.  512 keeps double-buffered blocks well under
    # v7x's 64 MiB VMEM even at large C.
    if tile_t is None:
        tile_t = min(512, _round_up(T, 8))
    tile_t = max(_round_up(tile_t, 8), _round_up(max(1, 2 * (rf - 1)), 8))
    n_t = -(-T // tile_t)                    # output time tiles
    t_pad = (n_t + 1) * tile_t               # padded input time (2-block windows)

    # channel-last, zero-pad: left 2*pad (both layers' "same" pad), right to
    # t_pad, channels to cin_p.  gelu(0)=0 so zero pads stay zero in-kernel.
    xt = jnp.transpose(x_ncw, (0, 2, 1)).astype(jnp.float32)      # (B, T, C_in)
    x_pad = jnp.pad(xt, ((0, 0), (2 * pad, t_pad - T - 2 * pad), (0, cin_p - C_in)))

    def stack_weight(w, scale):
        # (C_out, C_in_l, K) -> (K*C_in_l_padded, C_out_padded), calib folded, bf16
        c_in_l = w.shape[1]
        c_in_lp = _round_up(c_in_l, _LANE)
        w_kic = jnp.transpose(w * scale[:, None, None], (2, 1, 0))   # (K, Cin_l, Cout)
        w_kic = jnp.pad(w_kic, ((0, 0), (0, c_in_lp - c_in_l), (0, cout_p - C_out)))
        return w_kic.reshape(K * c_in_lp, cout_p).astype(jnp.bfloat16)

    def pad_bias(b, scale):
        return jnp.pad(b * scale, (0, cout_p - C_out))[None, :].astype(jnp.float32)

    # fold calibration:  conv(x, W*cw)*cf + b*cb*cf  ==  conv(x, W*cw*cf) + b*cb*cf
    w1s = stack_weight(params["w1"], params["cw1"] * params["cf1"])
    b1s = pad_bias(params["b1"], params["cb1"] * params["cf1"])
    w2s = stack_weight(params["w2"], params["cw2"] * params["cf2"])
    b2s = pad_bias(params["b2"], params["cb2"] * params["cf2"])

    args = [x_pad, x_pad, w1s, b1s, w2s, b2s]
    in_specs = [
        pl.BlockSpec((1, tile_t, cin_p), lambda b, i: (b, i, 0)),      # x block i
        pl.BlockSpec((1, tile_t, cin_p), lambda b, i: (b, i + 1, 0)),  # x block i+1
        pl.BlockSpec((K * cin_p, cout_p), lambda b, i: (0, 0)),
        pl.BlockSpec((1, cout_p), lambda b, i: (0, 0)),
        pl.BlockSpec((K * cout_p, cout_p), lambda b, i: (0, 0)),
        pl.BlockSpec((1, cout_p), lambda b, i: (0, 0)),
    ]
    if has_projector:
        wp = jnp.pad(params["proj_w"][:, :, 0].T,
                     ((0, cin_p - C_in), (0, cout_p - C_out))).astype(jnp.float32)
        bp = jnp.pad(params["proj_b"], (0, cout_p - C_out))[None, :].astype(jnp.float32)
        args += [wp, bp]
        in_specs += [pl.BlockSpec((cin_p, cout_p), lambda b, i: (0, 0)),
                     pl.BlockSpec((1, cout_p), lambda b, i: (0, 0))]

    kernel = functools.partial(
        _fsconv_block_kernel, K=K, dilation=dilation, pad=pad, tile_t=tile_t,
        seq_len=T, has_projector=has_projector)

    out = pl.pallas_call(
        kernel,
        out_shape=jax.ShapeDtypeStruct((B, n_t * tile_t, cout_p), jnp.float32),
        grid=(B, n_t),
        in_specs=in_specs,
        out_specs=pl.BlockSpec((1, tile_t, cout_p), lambda b, i: (b, i, 0)),
        compiler_params=pltpu.CompilerParams(
            dimension_semantics=("parallel", "parallel"),
            vmem_limit_bytes=64 * 1024 * 1024),
    )(*args)

    return jnp.transpose(out[:, :T, :C_out], (0, 2, 1))          # (B, C_out, T)


# ----------------------------------------------------------------------------
# deterministic parameter init (shapes follow the module's __init__)
# ----------------------------------------------------------------------------
def init_params(key, in_ch, out_ch, kernel_size, final=False):
    ks = jax.random.split(key, 12)
    s1 = 1.0 / np.sqrt(in_ch * kernel_size)
    s2 = 1.0 / np.sqrt(out_ch * kernel_size)
    p = {
        "w1": jax.random.uniform(ks[0], (out_ch, in_ch, kernel_size), jnp.float32, -s1, s1),
        "b1": jax.random.uniform(ks[1], (out_ch,), jnp.float32, -s1, s1),
        "w2": jax.random.uniform(ks[2], (out_ch, out_ch, kernel_size), jnp.float32, -s2, s2),
        "b2": jax.random.uniform(ks[3], (out_ch,), jnp.float32, -s2, s2),
        # FSConv calibration vectors (controller outputs, frozen here)
        "cw1": 1.0 + 0.05 * jax.random.normal(ks[4], (out_ch,), jnp.float32),
        "cb1": 1.0 + 0.05 * jax.random.normal(ks[5], (out_ch,), jnp.float32),
        "cf1": 1.0 + 0.05 * jax.random.normal(ks[6], (out_ch,), jnp.float32),
        "cw2": 1.0 + 0.05 * jax.random.normal(ks[7], (out_ch,), jnp.float32),
        "cb2": 1.0 + 0.05 * jax.random.normal(ks[8], (out_ch,), jnp.float32),
        "cf2": 1.0 + 0.05 * jax.random.normal(ks[9], (out_ch,), jnp.float32),
    }
    if in_ch != out_ch or final:
        sp = 1.0 / np.sqrt(in_ch)
        p["proj_w"] = jax.random.uniform(ks[10], (out_ch, in_ch, 1), jnp.float32, -sp, sp)
        p["proj_b"] = jax.random.uniform(ks[11], (out_ch,), jnp.float32, -sp, sp)
    else:
        p["proj_w"] = None
        p["proj_b"] = None
    return p


# ----------------------------------------------------------------------------
# pure-JAX fp32 reference (lax.conv_general_dilated) for correctness check
# ----------------------------------------------------------------------------
def ref_fsconv_block(x_ncw, params, kernel_size, dilation):
    def conv1d(h, w, b, dil):
        rf = (w.shape[-1] - 1) * dil + 1
        pad = rf // 2
        out = jax.lax.conv_general_dilated(
            h, w, window_strides=(1,), padding=[(pad, pad)],
            rhs_dilation=(dil,), dimension_numbers=("NCH", "OIH", "NCH"))
        out = out + b[None, :, None]
        if rf % 2 == 0:
            out = out[:, :, :-1]
        return out

    def fsconv(h, w, b, cw, cb, cf):
        return conv1d(h, w * cw[:, None, None], b * cb, dilation) * cf[None, :, None]

    if params["proj_w"] is not None:
        residual = conv1d(x_ncw, params["proj_w"], params["proj_b"], 1)
    else:
        residual = x_ncw
    h = _gelu_exact(x_ncw)
    h = fsconv(h, params["w1"], params["b1"], params["cw1"], params["cb1"], params["cf1"])
    h = _gelu_exact(h)
    h = fsconv(h, params["w2"], params["b2"], params["cw2"], params["cb2"], params["cf2"])
    return h + residual


if __name__ == "__main__":
    key = jax.random.PRNGKey(0)
    configs = [
        # (B, C_in, C_out, T, kernel_size, dilation)
        (2, 4, 8, 16, 3, 2),   # projector residual path, odd receptive field (rf=5)
        (2, 8, 8, 16, 2, 3),   # identity residual path, even receptive field (rf=4)
    ]
    for idx, (B, C_in, C_out, T, K, d) in enumerate(configs):
        kx, kp = jax.random.split(jax.random.fold_in(key, idx))
        x = jax.random.normal(kx, (B, C_in, T), jnp.float32)
        params = init_params(kp, C_in, C_out, K)

        out = jax.block_until_ready(fsconv_block_forward(x, params, K, d))
        assert out.shape == (B, C_out, T)

        ref = ref_fsconv_block(x, params, K, d)
        # bf16 MXU operands (fp32 accumulation) vs fp32 reference -> loose tol.
        np.testing.assert_allclose(np.asarray(out), np.asarray(ref),
                                   rtol=5e-2, atol=5e-2)

    print("KERNEL_OK")
</pallas_src>

<mosaic_0001>
module attributes {stable_mosaic.version = 11 : i64} {
  func.func @_fsconv_block_kernel(%arg0: i32, %arg1: i32, %arg2: memref<1x16x128xf32, #tpu.memory_space<vmem>>, %arg3: memref<1x16x128xf32, #tpu.memory_space<vmem>>, %arg4: memref<384x128xbf16, #tpu.memory_space<vmem>>, %arg5: memref<1x128xf32, #tpu.memory_space<vmem>>, %arg6: memref<384x128xbf16, #tpu.memory_space<vmem>>, %arg7: memref<1x128xf32, #tpu.memory_space<vmem>>, %arg8: memref<128x128xf32, #tpu.memory_space<vmem>>, %arg9: memref<1x128xf32, #tpu.memory_space<vmem>>, %arg10: memref<1x16x128xf32, #tpu.memory_space<vmem>>) attributes {dimension_semantics = [#tpu.dimension_semantics<parallel>, #tpu.dimension_semantics<parallel>], iteration_bounds = array<i64: 2, 1>, scalar_prefetch = 0 : i64, scratch_operands = 0 : i64, tpu.core_type = #tpu.core_type<tc>, window_params = [{transform_indices = @transform_0, window_bounds = array<i64: 1, 16, 128>}, {transform_indices = @transform_1, window_bounds = array<i64: 1, 16, 128>}, {pipeline_mode = #tpu.pipeline_mode<synchronous>, transform_indices = @transform_2, window_bounds = array<i64: 384, 128>}, {pipeline_mode = #tpu.pipeline_mode<synchronous>, transform_indices = @transform_3, window_bounds = array<i64: 1, 128>}, {pipeline_mode = #tpu.pipeline_mode<synchronous>, transform_indices = @transform_4, window_bounds = array<i64: 384, 128>}, {pipeline_mode = #tpu.pipeline_mode<synchronous>, transform_indices = @transform_5, window_bounds = array<i64: 1, 128>}, {pipeline_mode = #tpu.pipeline_mode<synchronous>, transform_indices = @transform_6, window_bounds = array<i64: 128, 128>}, {pipeline_mode = #tpu.pipeline_mode<synchronous>, transform_indices = @transform_7, window_bounds = array<i64: 1, 128>}, {transform_indices = @transform_8, window_bounds = array<i64: 1, 16, 128>}]} {
    %c0 = arith.constant 0 : index
    %c0_0 = arith.constant 0 : index
    %c0_1 = arith.constant 0 : index
    %0 = vector.load %arg2[%c0, %c0_0, %c0_1] : memref<1x16x128xf32, #tpu.memory_space<vmem>>, vector<1x16x128xf32>
    %1 = vector.shape_cast %0 : vector<1x16x128xf32> to vector<16x128xf32>
    %c0_2 = arith.constant 0 : index
    %c0_3 = arith.constant 0 : index
    %c0_4 = arith.constant 0 : index
    %2 = vector.load %arg3[%c0_2, %c0_3, %c0_4] : memref<1x16x128xf32, #tpu.memory_space<vmem>>, vector<1x16x128xf32>
    %3 = vector.shape_cast %2 : vector<1x16x128xf32> to vector<16x128xf32>
    %4 = tpu.concatenate %1, %3 in 0 : vector<16x128xf32>, vector<16x128xf32> -> vector<32x128xf32>
    %5 = vector.extract_strided_slice %4 {offsets = [4, 0], sizes = [16, 128], strides = [1, 1]} : vector<32x128xf32> to vector<16x128xf32>
    %c0_5 = arith.constant 0 : index
    %c0_6 = arith.constant 0 : index
    %6 = vector.load %arg8[%c0_5, %c0_6] : memref<128x128xf32, #tpu.memory_space<vmem>>, vector<128x128xf32>
    %cst = arith.constant dense<0.000000e+00> : vector<16x128xf32>
    %7 = tpu.matmul %5, %6, %cst {dimension_numbers = #tpu.dot_dimension_numbers<[1], [0], [0], [1], [0, 0, 1, 1], [], []>} : vector<16x128xf32>, vector<128x128xf32>, vector<16x128xf32> -> vector<16x128xf32>
    %c0_7 = arith.constant 0 : index
    %c0_8 = arith.constant 0 : index
    %8 = vector.load %arg9[%c0_7, %c0_8] : memref<1x128xf32, #tpu.memory_space<vmem>>, vector<1x128xf32>
    %9 = vector.broadcast %8 : vector<1x128xf32> to vector<16x128xf32>
    %10 = arith.addf %7, %9 : vector<16x128xf32>
    %cst_9 = arith.constant 5.000000e-01 : f32
    %11 = vector.broadcast %cst_9 : f32 to vector<32x128xf32>
    %12 = arith.mulf %11, %4 : vector<32x128xf32>
    %cst_10 = arith.constant 0.707106769 : f32
    %13 = vector.broadcast %cst_10 : f32 to vector<32x128xf32>
    %14 = arith.mulf %4, %13 : vector<32x128xf32>
    %15 = math.erf %14 : vector<32x128xf32>
    %cst_11 = arith.constant 1.000000e+00 : f32
    %16 = vector.broadcast %cst_11 : f32 to vector<32x128xf32>
    %17 = arith.addf %16, %15 : vector<32x128xf32>
    %18 = arith.mulf %12, %17 : vector<32x128xf32>
    %19 = arith.truncf %18 : vector<32x128xf32> to vector<32x128xbf16>
    %20 = vector.extract_strided_slice %19 {offsets = [0, 0], sizes = [20, 128], strides = [1, 1]} : vector<32x128xbf16> to vector<20x128xbf16>
    %21 = vector.extract_strided_slice %19 {offsets = [2, 0], sizes = [20, 128], strides = [1, 1]} : vector<32x128xbf16> to vector<20x128xbf16>
    %22 = vector.extract_strided_slice %19 {offsets = [4, 0], sizes = [20, 128], strides = [1, 1]} : vector<32x128xbf16> to vector<20x128xbf16>
    %23 = tpu.concatenate %20, %21, %22 in 1 : vector<20x128xbf16>, vector<20x128xbf16>, vector<20x128xbf16> -> vector<20x384xbf16>
    %c0_12 = arith.constant 0 : index
    %c0_13 = arith.constant 0 : index
    %24 = vector.load %arg4[%c0_12, %c0_13] : memref<384x128xbf16, #tpu.memory_space<vmem>>, vector<384x128xbf16>
    %cst_14 = arith.constant dense<0.000000e+00> : vector<20x128xf32>
    %25 = tpu.matmul %23, %24, %cst_14 {dimension_numbers = #tpu.dot_dimension_numbers<[1], [0], [0], [1], [0, 0, 1, 1], [], []>} : vector<20x384xbf16>, vector<384x128xbf16>, vector<20x128xf32> -> vector<20x128xf32>
    %c0_15 = arith.constant 0 : index
    %c0_16 = arith.constant 0 : index
    %26 = vector.load %arg5[%c0_15, %c0_16] : memref<1x128xf32, #tpu.memory_space<vmem>>, vector<1x128xf32>
    %27 = vector.broadcast %26 : vector<1x128xf32> to vector<20x128xf32>
    %28 = arith.addf %25, %27 : vector<20x128xf32>
    %cst_17 = arith.constant 5.000000e-01 : f32
    %29 = vector.broadcast %cst_17 : f32 to vector<20x128xf32>
    %30 = arith.mulf %29, %28 : vector<20x128xf32>
    %cst_18 = arith.constant 0.707106769 : f32
    %31 = vector.broadcast %cst_18 : f32 to vector<20x128xf32>
    %32 = arith.mulf %28, %31 : vector<20x128xf32>
    %33 = math.erf %32 : vector<20x128xf32>
    %cst_19 = arith.constant 1.000000e+00 : f32
    %34 = vector.broadcast %cst_19 : f32 to vector<20x128xf32>
    %35 = arith.addf %34, %33 : vector<20x128xf32>
    %36 = arith.mulf %30, %35 : vector<20x128xf32>
    %c16_i32 = arith.constant 16 : i32
    %37 = arith.muli %arg1, %c16_i32 : i32
    %c2_i32 = arith.constant 2 : i32
    %38 = arith.subi %37, %c2_i32 : i32
    %39 = tpu.iota {dimensions = array<i32: 0>} : vector<20x1xi32>
    %40 = vector.broadcast %38 : i32 to vector<20x1xi32>
    %41 = arith.addi %40, %39 : vector<20x1xi32>
    %c0_i32 = arith.constant 0 : i32
    %42 = vector.broadcast %c0_i32 : i32 to vector<20x1xi32>
    %43 = arith.cmpi sge, %41, %42 : vector<20x1xi32>
    %c16_i32_20 = arith.constant 16 : i32
    %44 = vector.broadcast %c16_i32_20 : i32 to vector<20x1xi32>
    %45 = arith.cmpi slt, %41, %44 : vector<20x1xi32>
    %46 = arith.andi %43, %45 : vector<20x1xi1>
    %cst_21 = arith.constant 0.000000e+00 : f32
    %47 = vector.shape_cast %46 : vector<20x1xi1> to vector<20x1xi1>
    %48 = vector.broadcast %47 : vector<20x1xi1> to vector<20x128xi1>
    %49 = vector.broadcast %cst_21 : f32 to vector<20x128xf32>
    %50 = arith.select %48, %36, %49 : vector<20x128xi1>, vector<20x128xf32>
    %51 = arith.truncf %50 : vector<20x128xf32> to vector<20x128xbf16>
    %52 = vector.extract_strided_slice %51 {offsets = [0, 0], sizes = [16, 128], strides = [1, 1]} : vector<20x128xbf16> to vector<16x128xbf16>
    %53 = vector.extract_strided_slice %51 {offsets = [2, 0], sizes = [16, 128], strides = [1, 1]} : vector<20x128xbf16> to vector<16x128xbf16>
    %54 = vector.extract_strided_slice %51 {offsets = [4, 0], sizes = [16, 128], strides = [1, 1]} : vector<20x128xbf16> to vector<16x128xbf16>
    %55 = tpu.concatenate %52, %53, %54 in 1 : vector<16x128xbf16>, vector<16x128xbf16>, vector<16x128xbf16> -> vector<16x384xbf16>
    %c0_22 = arith.constant 0 : index
    %c0_23 = arith.constant 0 : index
    %56 = vector.load %arg6[%c0_22, %c0_23] : memref<384x128xbf16, #tpu.memory_space<vmem>>, vector<384x128xbf16>
    %cst_24 = arith.constant dense<0.000000e+00> : vector<16x128xf32>
    %57 = tpu.matmul %55, %56, %cst_24 {dimension_numbers = #tpu.dot_dimension_numbers<[1], [0], [0], [1], [0, 0, 1, 1], [], []>} : vector<16x384xbf16>, vector<384x128xbf16>, vector<16x128xf32> -> vector<16x128xf32>
    %c0_25 = arith.constant 0 : index
    %c0_26 = arith.constant 0 : index
    %58 = vector.load %arg7[%c0_25, %c0_26] : memref<1x128xf32, #tpu.memory_space<vmem>>, vector<1x128xf32>
    %59 = vector.broadcast %58 : vector<1x128xf32> to vector<16x128xf32>
    %60 = arith.addf %57, %59 : vector<16x128xf32>
    %61 = arith.addf %60, %10 : vector<16x128xf32>
    %c0_27 = arith.constant 0 : index
    %c0_28 = arith.constant 0 : index
    %c0_29 = arith.constant 0 : index
    %62 = vector.load %arg10[%c0_27, %c0_28, %c0_29] : memref<1x16x128xf32, #tpu.memory_space<vmem>>, vector<1x16x128xf32>
    %63 = vector.shape_cast %62 : vector<1x16x128xf32> to vector<16x128xf32>
    %64 = vector.shape_cast %61 : vector<16x128xf32> to vector<1x16x128xf32>
    tpu.vector_store %arg10[%c0_27, %c0_28, %c0_29], %64 {strides = array<i32>} : memref<1x16x128xf32, #tpu.memory_space<vmem>>, vector<1x16x128xf32>,
    return
  }
  func.func @transform_0(%arg0: i32, %arg1: i32) -> (i32, i32, i32) {
    %c0_i32 = arith.constant 0 : i32
    %c0_i32_0 = arith.constant 0 : i32
    return %arg0, %arg1, %c0_i32 : i32, i32, i32
  }
  func.func @transform_1(%arg0: i32, %arg1: i32) -> (i32, i32, i32) {
    %c1_i32 = arith.constant 1 : i32
    %0 = arith.addi %arg1, %c1_i32 : i32
    %c0_i32 = arith.constant 0 : i32
    %c0_i32_0 = arith.constant 0 : i32
    return %arg0, %0, %c0_i32 : i32, i32, i32
  }
  func.func @transform_2(%arg0: i32, %arg1: i32) -> (i32, i32) {
    %c0_i32 = arith.constant 0 : i32
    %c0_i32_0 = arith.constant 0 : i32
    %c0_i32_1 = arith.constant 0 : i32
    return %c0_i32, %c0_i32_0 : i32, i32
  }
  func.func @transform_3(%arg0: i32, %arg1: i32) -> (i32, i32) {
    %c0_i32 = arith.constant 0 : i32
    %c0_i32_0 = arith.constant 0 : i32
    %c0_i32_1 = arith.constant 0 : i32
    return %c0_i32, %c0_i32_0 : i32, i32
  }
  func.func @transform_4(%arg0: i32, %arg1: i32) -> (i32, i32) {
    %c0_i32 = arith.constant 0 : i32
    %c0_i32_0 = arith.constant 0 : i32
    %c0_i32_1 = arith.constant 0 : i32
    return %c0_i32, %c0_i32_0 : i32, i32
  }
  func.func @transform_5(%arg0: i32, %arg1: i32) -> (i32, i32) {
    %c0_i32 = arith.constant 0 : i32
    %c0_i32_0 = arith.constant 0 : i32
    %c0_i32_1 = arith.constant 0 : i32
    return %c0_i32, %c0_i32_0 : i32, i32
  }
  func.func @transform_6(%arg0: i32, %arg1: i32) -> (i32, i32) {
    %c0_i32 = arith.constant 0 : i32
    %c0_i32_0 = arith.constant 0 : i32
    %c0_i32_1 = arith.constant 0 : i32
    return %c0_i32, %c0_i32_0 : i32, i32
  }
  func.func @transform_7(%arg0: i32, %arg1: i32) -> (i32, i32) {
    %c0_i32 = arith.constant 0 : i32
    %c0_i32_0 = arith.constant 0 : i32
    %c0_i32_1 = arith.constant 0 : i32
    return %c0_i32, %c0_i32_0 : i32, i32
  }
  func.func @transform_8(%arg0: i32, %arg1: i32) -> (i32, i32, i32) {
    %c0_i32 = arith.constant 0 : i32
    %c0_i32_0 = arith.constant 0 : i32
    return %arg0, %arg1, %c0_i32 : i32, i32, i32
  }
}

</mosaic_0001>

<llo_original>
// kernel: tpu_custom_call.1
$region0: #{tpu_custom_call.1}
  #allocation0 [shape = 'u32[]', space=smem, size = 0x4, offset = 0x4, fixed_abs, tag = 'smem constant byte address 0x4 - core index']
  #allocation1 [shape = 'u32[144,128]{1,0:T(1,128)}', space=vmem, size = 0x12000, scoped, tag = 'internal scratch']
  %s0 = inlined_call_operand.hbm [shape: f32[2,32,128], index: 0, kind: input, shape index: {}]
  %s1 = inlined_call_operand.hbm [shape: f32[2,32,128], index: 1, kind: input, shape index: {}]
  %s2 = inlined_call_operand.hbm [shape: bf16[384,128], index: 2, kind: input, shape index: {}]
  %s3 = inlined_call_operand.hbm [shape: f32[1,128], index: 3, kind: input, shape index: {}]
  %s4 = inlined_call_operand.hbm [shape: bf16[384,128], index: 4, kind: input, shape index: {}]
  %s5 = inlined_call_operand.hbm [shape: f32[1,128], index: 5, kind: input, shape index: {}]
  %s6 = inlined_call_operand.hbm [shape: f32[128,128], index: 6, kind: input, shape index: {}]
  %s7 = inlined_call_operand.hbm [shape: f32[1,128], index: 7, kind: input, shape index: {}]
  %s8 = inlined_call_operand.hbm [shape: f32[2,16,128], index: 8, kind: output, shape index: {}]
  %s9 = sld [smem:[#allocation0]]
  $region97: #{tpu_custom_call.1} parent=0
    _
  %s11 = ssub.s32 1, %s9
  %s12 = scalar_select 0, %s11, %s9
  $region1: #{tpu_custom_call.1} parent=0
    #allocation2 [shape = 'u8[16384]{0}', space=vmem, size = 0x4000, scoped, tag = 'input window, operand 0']
    #allocation3 [shape = 's32[2]{0}', space=sflag, size = 0x8, scoped, tag = 'scoped memory for tpu_custom_call.1']
    #allocation4 [shape = 's32[2]{0}', space=sflag, size = 0x8, scoped, tag = 'scoped memory for tpu_custom_call.1']
    #allocation5 [shape = 'u8[16384]{0}', space=vmem, size = 0x4000, scoped, tag = 'input window, operand 1']
    #allocation6 [shape = 's32[2]{0}', space=sflag, size = 0x8, scoped, tag = 'scoped memory for tpu_custom_call.1']
    #allocation7 [shape = 'u8[98304]{0}', space=vmem, size = 0x18000, scoped, tag = 'input window, operand 2, single buffered']
    #allocation8 [shape = 'u8[512]{0}', space=vmem, size = 0x400, scoped, tag = 'input window, operand 3, single buffered']
    #allocation9 [shape = 's32[1]{0}', space=sflag, size = 0x4, scoped, tag = 'scoped memory for tpu_custom_call.1']
    #allocation10 [shape = 'u8[98304]{0}', space=vmem, size = 0x18000, scoped, tag = 'input window, operand 4, single buffered']
    #allocation11 [shape = 'u8[512]{0}', space=vmem, size = 0x400, scoped, tag = 'input window, operand 5, single buffered']
    #allocation12 [shape = 's32[1]{0}', space=sflag, size = 0x4, scoped, tag = 'scoped memory for tpu_custom_call.1']
    #allocation13 [shape = 'u8[65536]{0}', space=vmem, size = 0x10000, scoped, tag = 'input window, operand 6, single buffered']
    #allocation14 [shape = 'u8[512]{0}', space=vmem, size = 0x400, scoped, tag = 'input window, operand 7, single buffered']
    #allocation15 [shape = 's32[1]{0}', space=sflag, size = 0x4, scoped, tag = 'scoped memory for tpu_custom_call.1']
    #allocation16 [shape = 'u8[16384]{0}', space=vmem, size = 0x4000, scoped, tag = 'output window, operand 0']
    %13 = vsyncpa [#allocation3], 0
    %s14 = scalar_lea.sflag [#allocation3], 1
    %15 = vsyncpa %s14, 0
    %16 = vsyncpa [#allocation6], 0
    %s17 = scalar_lea.sflag [#allocation6], 1
    %18 = vsyncpa %s17, 0
    %19 = vsyncpa [#allocation9], 0
    %20 = vsyncpa [#allocation12], 0
    %21 = vsyncpa [#allocation15], 0
    %22 = vsyncpa [#allocation4], 0
    %s23 = scalar_lea.sflag [#allocation4], 1
    %24 = vsyncpa %s23, 0
    loop: start=0, step=1, limit=4
    $region2: #{tpu_custom_call.1} parent=1 // loop_pre_header
      _
    $region3: #{tpu_custom_call.1} parent=1 // loop_header
      %s26 = sphi 0, %s30
      %p27 = scmp.ge.s32.totalorder %s26, 4
      %s33 = sphi 0, %s45
      %s34 = sphi 0, %s41
      %s35 = sphi 0, %s33
      %s36 = sphi 0, %s34
      %s37 = sphi 0, %s35
      %s38 = sphi 0, %s36
      %s50 = sphi 0, %s52
      %s53 = sphi 0, %s50
      %s54 = sphi 0, %s53
      %s70 = sphi 0, %s54
      %s80 = sphi 0, %s82
      %s83 = sphi 0, %s80
      %s84 = sphi 0, %s83
      %s100 = sphi 0, %s84
      %s104 = sphi 0, %s104
      %s106 = sphi 0, %s104
      %s107 = sphi 0, %s106
      %s121 = sphi 0, %s107
      %s125 = sphi 0, %s125
      %s127 = sphi 0, %s125
      %s128 = sphi 0, %s127
      %s142 = sphi 0, %s128
      %s146 = sphi 0, %s146
      %s148 = sphi 0, %s146
      %s149 = sphi 0, %s148
      %s163 = sphi 0, %s149
      %s167 = sphi 0, %s167
      %s169 = sphi 0, %s167
      %s170 = sphi 0, %s169
      %s184 = sphi 0, %s170
      %s188 = sphi 0, %s188
      %s190 = sphi 0, %s188
      %s191 = sphi 0, %s190
      %s205 = sphi 0, %s191
      %s209 = sphi 0, %s209
      %s211 = sphi 0, %s209
      %s212 = sphi 0, %s211
      %s226 = sphi 0, %s212
      %s234 = sphi 0, %s236
      %s237 = sphi 0, %s234
      %s238 = sphi 0, %s237
      %s254 = sphi 0, %s238
    $region4: #{tpu_custom_call.1} parent=1 // loop_header_branch
      %29 = sbr.rel (%p27) target = $region8
    $region5: #{tpu_custom_call.1} parent=1 // loop_body
      %s31 = ssub.s32 %s26, 1
      %s32 = ssub.s32 %s26, 2
      %s39 = sadd.s32 1, %s34
      %p40 = scmp.ge.s32.totalorder %s39, 1
      %s41 = scalar_select %p40, 0, %s39
      %s42 = sadd.s32 1, %s33
      %s43 = scalar_select %p40, %s42, %s33
      %p44 = scmp.ge.s32.totalorder %s43, 2
      %s45 = scalar_select %p44, 0, %s43
      %s46 = ssub.s32 %s33, %s45
      %s47 = ssub.s32 %s34, %s41
      %s48 = sor.u32 %s46, %s47
      %p49 = scmp.eq.s32.totalorder %s48, 0
      %s51 = sadd.s32 %s50, 1
      %s52 = scalar_select %p49, %s50, %s51
      %p55 = pneg %p49
      %p56 = scmp.eq.s32.totalorder %s26, 1
      %p57 = por %p55, %p56
      %p58 = scmp.ne.s32.totalorder %s50, %s53
      %p59 = scmp.eq.s32.totalorder %s26, 0
      %p60 = por %p58, %p59
      %p61 = scmp.ne.s32.totalorder %s50, %s53
      %p62 = scmp.eq.s32.totalorder %s31, 1
      %p63 = por %p61, %p62
      %p64 = scmp.ne.s32.totalorder %s53, %s54
      %p65 = scmp.eq.s32.totalorder %s31, 0
      %p66 = por %p64, %p65
      %p67 = scmp.ne.s32.totalorder %s53, %s54
      %p68 = scmp.eq.s32.totalorder %s32, 1
      %p69 = por %p67, %p68
      %p71 = scmp.ne.s32.totalorder %s54, %s70
      %p72 = scmp.eq.s32.totalorder %s32, 0
      %p73 = por %p71, %p72
      %s74 = sadd.s32 %s34, 1
      %s75 = sadd.s32 %s41, 1
      %s76 = ssub.s32 %s33, %s45
      %s77 = ssub.s32 %s74, %s75
      %s78 = sor.u32 %s76, %s77
      %p79 = scmp.eq.s32.totalorder %s78, 0
      %s81 = sadd.s32 %s80, 1
      %s82 = scalar_select %p79, %s80, %s81
      %p85 = pneg %p79
      %p86 = scmp.eq.s32.totalorder %s26, 1
      %p87 = por %p85, %p86
      %p88 = scmp.ne.s32.totalorder %s80, %s83
      %p89 = scmp.eq.s32.totalorder %s26, 0
      %p90 = por %p88, %p89
      %p91 = scmp.ne.s32.totalorder %s80, %s83
      %p92 = scmp.eq.s32.totalorder %s31, 1
      %p93 = por %p91, %p92
      %p94 = scmp.ne.s32.totalorder %s83, %s84
      %p95 = scmp.eq.s32.totalorder %s31, 0
      %p96 = por %p94, %p95
      %p97 = scmp.ne.s32.totalorder %s83, %s84
      %p98 = scmp.eq.s32.totalorder %s32, 1
      %p99 = por %p97, %p98
      %p101 = scmp.ne.s32.totalorder %s84, %s100
      %p102 = scmp.eq.s32.totalorder %s32, 0
      %p103 = por %p101, %p102
      %s105 = sadd.s32 %s104, 1
      %p108 = scmp.eq.s32.totalorder %s26, 1
      %p109 = scmp.ne.s32.totalorder %s104, %s106
      %p110 = scmp.eq.s32.totalorder %s26, 0
      %p111 = por %p109, %p110
      %p112 = scmp.ne.s32.totalorder %s104, %s106
      %p113 = scmp.eq.s32.totalorder %s31, 1
      %p114 = por %p112, %p113
      %p115 = scmp.ne.s32.totalorder %s106, %s107
      %p116 = scmp.eq.s32.totalorder %s31, 0
      %p117 = por %p115, %p116
      %p118 = scmp.ne.s32.totalorder %s106, %s107
      %p119 = scmp.eq.s32.totalorder %s32, 1
      %p120 = por %p118, %p119
      %p122 = scmp.ne.s32.totalorder %s107, %s121
      %p123 = scmp.eq.s32.totalorder %s32, 0
      %p124 = por %p122, %p123
      %s126 = sadd.s32 %s125, 1
      %p129 = scmp.eq.s32.totalorder %s26, 1
      %p130 = scmp.ne.s32.totalorder %s125, %s127
      %p131 = scmp.eq.s32.totalorder %s26, 0
      %p132 = por %p130, %p131
      %p133 = scmp.ne.s32.totalorder %s125, %s127
      %p134 = scmp.eq.s32.totalorder %s31, 1
      %p135 = por %p133, %p134
      %p136 = scmp.ne.s32.totalorder %s127, %s128
      %p137 = scmp.eq.s32.totalorder %s31, 0
      %p138 = por %p136, %p137
      %p139 = scmp.ne.s32.totalorder %s127, %s128
      %p140 = scmp.eq.s32.totalorder %s32, 1
      %p141 = por %p139, %p140
      %p143 = scmp.ne.s32.totalorder %s128, %s142
      %p144 = scmp.eq.s32.totalorder %s32, 0
      %p145 = por %p143, %p144
      %s147 = sadd.s32 %s146, 1
      %p150 = scmp.eq.s32.totalorder %s26, 1
      %p151 = scmp.ne.s32.totalorder %s146, %s148
      %p152 = scmp.eq.s32.totalorder %s26, 0
      %p153 = por %p151, %p152
      %p154 = scmp.ne.s32.totalorder %s146, %s148
      %p155 = scmp.eq.s32.totalorder %s31, 1
      %p156 = por %p154, %p155
      %p157 = scmp.ne.s32.totalorder %s148, %s149
      %p158 = scmp.eq.s32.totalorder %s31, 0
      %p159 = por %p157, %p158
      %p160 = scmp.ne.s32.totalorder %s148, %s149
      %p161 = scmp.eq.s32.totalorder %s32, 1
      %p162 = por %p160, %p161
      %p164 = scmp.ne.s32.totalorder %s149, %s163
      %p165 = scmp.eq.s32.totalorder %s32, 0
      %p166 = por %p164, %p165
      %s168 = sadd.s32 %s167, 1
      %p171 = scmp.eq.s32.totalorder %s26, 1
      %p172 = scmp.ne.s32.totalorder %s167, %s169
      %p173 = scmp.eq.s32.totalorder %s26, 0
      %p174 = por %p172, %p173
      %p175 = scmp.ne.s32.totalorder %s167, %s169
      %p176 = scmp.eq.s32.totalorder %s31, 1
      %p177 = por %p175, %p176
      %p178 = scmp.ne.s32.totalorder %s169, %s170
      %p179 = scmp.eq.s32.totalorder %s31, 0
      %p180 = por %p178, %p179
      %p181 = scmp.ne.s32.totalorder %s169, %s170
      %p182 = scmp.eq.s32.totalorder %s32, 1
      %p183 = por %p181, %p182
      %p185 = scmp.ne.s32.totalorder %s170, %s184
      %p186 = scmp.eq.s32.totalorder %s32, 0
      %p187 = por %p185, %p186
      %s189 = sadd.s32 %s188, 1
      %p192 = scmp.eq.s32.totalorder %s26, 1
      %p193 = scmp.ne.s32.totalorder %s188, %s190
      %p194 = scmp.eq.s32.totalorder %s26, 0
      %p195 = por %p193, %p194
      %p196 = scmp.ne.s32.totalorder %s188, %s190
      %p197 = scmp.eq.s32.totalorder %s31, 1
      %p198 = por %p196, %p197
      %p199 = scmp.ne.s32.totalorder %s190, %s191
      %p200 = scmp.eq.s32.totalorder %s31, 0
      %p201 = por %p199, %p200
      %p202 = scmp.ne.s32.totalorder %s190, %s191
      %p203 = scmp.eq.s32.totalorder %s32, 1
      %p204 = por %p202, %p203
      %p206 = scmp.ne.s32.totalorder %s191, %s205
      %p207 = scmp.eq.s32.totalorder %s32, 0
      %p208 = por %p206, %p207
      %s210 = sadd.s32 %s209, 1
      %p213 = scmp.eq.s32.totalorder %s26, 1
      %p214 = scmp.ne.s32.totalorder %s209, %s211
      %p215 = scmp.eq.s32.totalorder %s26, 0
      %p216 = por %p214, %p215
      %p217 = scmp.ne.s32.totalorder %s209, %s211
      %p218 = scmp.eq.s32.totalorder %s31, 1
      %p219 = por %p217, %p218
      %p220 = scmp.ne.s32.totalorder %s211, %s212
      %p221 = scmp.eq.s32.totalorder %s31, 0
      %p222 = por %p220, %p221
      %p223 = scmp.ne.s32.totalorder %s211, %s212
      %p224 = scmp.eq.s32.totalorder %s32, 1
      %p225 = por %p223, %p224
      %p227 = scmp.ne.s32.totalorder %s212, %s226
      %p228 = scmp.eq.s32.totalorder %s32, 0
      %p229 = por %p227, %p228
      %s230 = ssub.s32 %s33, %s45
      %s231 = ssub.s32 %s34, %s41
      %s232 = sor.u32 %s230, %s231
      %p233 = scmp.eq.s32.totalorder %s232, 0
      %s235 = sadd.s32 %s234, 1
      %s236 = scalar_select %p233, %s234, %s235
      %p239 = pneg %p233
      %p240 = scmp.eq.s32.totalorder %s26, 1
      %p241 = por %p239, %p240
      %p242 = scmp.ne.s32.totalorder %s234, %s237
      %p243 = scmp.eq.s32.totalorder %s26, 0
      %p244 = por %p242, %p243
      %p245 = scmp.ne.s32.totalorder %s234, %s237
      %p246 = scmp.eq.s32.totalorder %s31, 1
      %p247 = por %p245, %p246
      %p248 = scmp.ne.s32.totalorder %s237, %s238
      %p249 = scmp.eq.s32.totalorder %s31, 0
      %p250 = por %p248, %p249
      %p251 = scmp.ne.s32.totalorder %s237, %s238
      %p252 = scmp.eq.s32.totalorder %s32, 1
      %p253 = por %p251, %p252
      %p255 = scmp.ne.s32.totalorder %s238, %s254
      %p256 = scmp.eq.s32.totalorder %s32, 0
      %p257 = por %p255, %p256
      %p258 = scmp.le.s32.totalorder 1, %s26
      %p259 = scmp.lt.s32.totalorder %s26, 3
      %p260 = pnand %p258, %p259
      %p261 = pneg %p260
      // Predicated region
      $region9: #{tpu_custom_call.1} parent=5 // pred_check
        _
      $region10: #{tpu_custom_call.1} parent=5 // pred_check_branch
        %263 = sbr.rel (%p260) target = $region12
      $region11: #{tpu_custom_call.1} parent=5 // pred_region
        %s264 = ssub.s32 %s26, 1
        // Predicated region
        $region13: #{tpu_custom_call.1} parent=11 // pred_check
          %p265 = pneg %p117
        $region14: #{tpu_custom_call.1} parent=11 // pred_check_branch
          %267 = sbr.rel (%p265) target = $region16
        $region15: #{tpu_custom_call.1} parent=11 // pred_region
          %s269 = ssub.s32 3072, 3072
          %270 = vsyncadd [#allocation6], %s269
          %s271 = sshll.u32 [#allocation7], 4
          %s272 = int_to_ptr.vmem [resolvable:$true] %s271
          %277 = dma.hbm_to_vmem [thread:$0]  %s2, 3072, %s272, [#allocation6], 64, 64, 4
        $region16: #{tpu_custom_call.1} parent=11 // pred_fallthru
          _
        // Predicated region
        $region17: #{tpu_custom_call.1} parent=11 // pred_check
          %p278 = pneg %p138
        $region18: #{tpu_custom_call.1} parent=11 // pred_check_branch
          %280 = sbr.rel (%p278) target = $region20
        $region19: #{tpu_custom_call.1} parent=11 // pred_region
          %s282 = ssub.s32 16, 16
          %283 = vsyncadd [#allocation9], %s282
          %s285 = sshll.u32 [#allocation8], 4
          %s286 = int_to_ptr.vmem [resolvable:$true] %s285
          %288 = dma.hbm_to_vmem [thread:$0]  %s3, 16, %s286, [#allocation9]
        $region20: #{tpu_custom_call.1} parent=11 // pred_fallthru
          _
        // Predicated region
        $region21: #{tpu_custom_call.1} parent=11 // pred_check
          %p289 = pneg %p159
        $region22: #{tpu_custom_call.1} parent=11 // pred_check_branch
          %291 = sbr.rel (%p289) target = $region24
        $region23: #{tpu_custom_call.1} parent=11 // pred_region
          %s293 = ssub.s32 3072, 3072
          %294 = vsyncadd [#allocation9], %s293
          %s295 = sshll.u32 [#allocation10], 4
          %s296 = int_to_ptr.vmem [resolvable:$true] %s295
          %301 = dma.hbm_to_vmem [thread:$0]  %s4, 3072, %s296, [#allocation9], 64, 64, 4
        $region24: #{tpu_custom_call.1} parent=11 // pred_fallthru
          _
        // Predicated region
        $region25: #{tpu_custom_call.1} parent=11 // pred_check
          %p302 = pneg %p180
        $region26: #{tpu_custom_call.1} parent=11 // pred_check_branch
          %304 = sbr.rel (%p302) target = $region28
        $region27: #{tpu_custom_call.1} parent=11 // pred_region
          %s306 = ssub.s32 16, 16
          %307 = vsyncadd [#allocation12], %s306
          %s309 = sshll.u32 [#allocation11], 4
          %s310 = int_to_ptr.vmem [resolvable:$true] %s309
          %312 = dma.hbm_to_vmem [thread:$0]  %s5, 16, %s310, [#allocation12]
        $region28: #{tpu_custom_call.1} parent=11 // pred_fallthru
          _
        // Predicated region
        $region29: #{tpu_custom_call.1} parent=11 // pred_check
          %p313 = pneg %p201
        $region30: #{tpu_custom_call.1} parent=11 // pred_check_branch
          %315 = sbr.rel (%p313) target = $region32
        $region31: #{tpu_custom_call.1} parent=11 // pred_region
          %s317 = ssub.s32 2048, 2048
          %318 = vsyncadd [#allocation12], %s317
          %s319 = sshll.u32 [#allocation13], 4
          %s320 = int_to_ptr.vmem [resolvable:$true] %s319
          %325 = dma.hbm_to_vmem [thread:$0]  %s6, 2048, %s320, [#allocation12], 128, 128, 8
        $region32: #{tpu_custom_call.1} parent=11 // pred_fallthru
          _
        // Predicated region
        $region33: #{tpu_custom_call.1} parent=11 // pred_check
          %p326 = pneg %p222
        $region34: #{tpu_custom_call.1} parent=11 // pred_check_branch
          %328 = sbr.rel (%p326) target = $region36
        $region35: #{tpu_custom_call.1} parent=11 // pred_region
          %s330 = ssub.s32 16, 16
          %331 = vsyncadd [#allocation15], %s330
          %s333 = sshll.u32 [#allocation14], 4
          %s334 = int_to_ptr.vmem [resolvable:$true] %s333
          %336 = dma.hbm_to_vmem [thread:$0]  %s7, 16, %s334, [#allocation15]
        $region36: #{tpu_custom_call.1} parent=11 // pred_fallthru
          _
      $region12: #{tpu_custom_call.1} parent=5 // pred_fallthru
        _
      %p337 = scmp.lt.s32.totalorder %s26, 2
      // Predicated region
      $region37: #{tpu_custom_call.1} parent=5 // pred_check
        %p338 = pneg %p337
      $region38: #{tpu_custom_call.1} parent=5 // pred_check_branch
        %340 = sbr.rel (%p338) target = $region40
      $region39: #{tpu_custom_call.1} parent=5 // pred_region
        // Predicated region
        $region41: #{tpu_custom_call.1} parent=39 // pred_check
          %p341 = pneg %p60
        $region42: #{tpu_custom_call.1} parent=39 // pred_check_branch
          %343 = sbr.rel (%p341) target = $region44
        $region43: #{tpu_custom_call.1} parent=39 // pred_region
          %s344 = sand.u32 %s50, 1
          %s345 = scalar_lea.sflag [#allocation3], %s344
          %s346 = sand.u32 %s50, 1
          %s347 = smul.addr %s346, 16
          %s348 = scalar_lea.vmem [#allocation2], %s347
          %s349 = smul.u32 2, %s34
          %s351 = ssub.s32 256, 256
          %352 = vsyncadd %s345, %s351
          %s353 = smul.addr %s33, 4
          %s354 = sadd.s32 %s349, %s353
          %s355 = smul.addr %s354, 128
          %s356 = scalar_lea.hbm %s0, %s355
          %s357 = sshll.u32 %s348, 4
          %s358 = int_to_ptr.vmem [resolvable:$true] %s357
          %363 = dma.hbm_to_vmem [thread:$0]  %s356, 256, %s358, %s345, 128, 128, 8
        $region44: #{tpu_custom_call.1} parent=39 // pred_fallthru
          _
        // Predicated region
        $region45: #{tpu_custom_call.1} parent=39 // pred_check
          %p364 = pneg %p90
        $region46: #{tpu_custom_call.1} parent=39 // pred_check_branch
          %366 = sbr.rel (%p364) target = $region48
        $region47: #{tpu_custom_call.1} parent=39 // pred_region
          %s367 = sand.u32 %s26, 1
          %s368 = scalar_lea.sflag [#allocation6], %s367
          %s369 = sand.u32 %s80, 1
          %s370 = smul.addr %s369, 16
          %s371 = scalar_lea.vmem [#allocation5], %s370
          %s372 = sadd.s32 %s34, 1
          %s373 = smul.u32 2, %s372
          %s375 = ssub.s32 256, 256
          %376 = vsyncadd %s368, %s375
          %s377 = smul.addr %s33, 4
          %s378 = sadd.s32 %s373, %s377
          %s379 = smul.addr %s378, 128
          %s380 = scalar_lea.hbm %s1, %s379
          %s381 = sshll.u32 %s371, 4
          %s382 = int_to_ptr.vmem [resolvable:$true] %s381
          %387 = dma.hbm_to_vmem [thread:$0]  %s380, 256, %s382, %s368, 128, 128, 8
        $region48: #{tpu_custom_call.1} parent=39 // pred_fallthru
          _
      $region40: #{tpu_custom_call.1} parent=5 // pred_fallthru
        _
      %p388 = scmp.le.s32.totalorder 1, %s26
      %p389 = scmp.lt.s32.totalorder %s26, 3
      %p390 = pnand %p388, %p389
      %p391 = pneg %p390
      // Predicated region
      $region49: #{tpu_custom_call.1} parent=5 // pred_check
        _
      $region50: #{tpu_custom_call.1} parent=5 // pred_check_branch
        %393 = sbr.rel (%p390) target = $region52
      $region51: #{tpu_custom_call.1} parent=5 // pred_region
        %s394 = ssub.s32 %s26, 1
        %s395 = sand.u32 %s53, 1
        %s396 = scalar_lea.sflag [#allocation3], %s395
        %s397 = sand.u32 %s53, 1
        %s398 = smul.addr %s397, 16
        %s399 = scalar_lea.vmem [#allocation2], %s398
        // Predicated region
        $region53: #{tpu_custom_call.1} parent=51 // pred_check
          %p400 = pneg %p66
        $region54: #{tpu_custom_call.1} parent=51 // pred_check_branch
          %402 = sbr.rel (%p400) target = $region56
        $region55: #{tpu_custom_call.1} parent=51 // pred_region
          %403 = dma.done %s396, 256
        $region56: #{tpu_custom_call.1} parent=51 // pred_fallthru
          _
        %s404 = sand.u32 %s31, 1
        %s405 = scalar_lea.sflag [#allocation6], %s404
        %s406 = sand.u32 %s83, 1
        %s407 = smul.addr %s406, 16
        %s408 = scalar_lea.vmem [#allocation5], %s407
        // Predicated region
        $region57: #{tpu_custom_call.1} parent=51 // pred_check
          %p409 = pneg %p96
        $region58: #{tpu_custom_call.1} parent=51 // pred_check_branch
          %411 = sbr.rel (%p409) target = $region60
        $region59: #{tpu_custom_call.1} parent=51 // pred_region
          %412 = dma.done %s405, 256
        $region60: #{tpu_custom_call.1} parent=51 // pred_fallthru
          _
        // Predicated region
        $region61: #{tpu_custom_call.1} parent=51 // pred_check
          %p413 = pneg %p117
        $region62: #{tpu_custom_call.1} parent=51 // pred_check_branch
          %415 = sbr.rel (%p413) target = $region64
        $region63: #{tpu_custom_call.1} parent=51 // pred_region
          %416 = dma.done [#allocation6], 3072
        $region64: #{tpu_custom_call.1} parent=51 // pred_fallthru
          _
        // Predicated region
        $region65: #{tpu_custom_call.1} parent=51 // pred_check
          %p417 = pneg %p138
        $region66: #{tpu_custom_call.1} parent=51 // pred_check_branch
          %419 = sbr.rel (%p417) target = $region68
        $region67: #{tpu_custom_call.1} parent=51 // pred_region
          %420 = dma.done [#allocation9], 16
        $region68: #{tpu_custom_call.1} parent=51 // pred_fallthru
          _
        // Predicated region
        $region69: #{tpu_custom_call.1} parent=51 // pred_check
          %p421 = pneg %p159
        $region70: #{tpu_custom_call.1} parent=51 // pred_check_branch
          %423 = sbr.rel (%p421) target = $region72
        $region71: #{tpu_custom_call.1} parent=51 // pred_region
          %424 = dma.done [#allocation9], 3072
        $region72: #{tpu_custom_call.1} parent=51 // pred_fallthru
          _
        // Predicated region
        $region73: #{tpu_custom_call.1} parent=51 // pred_check
          %p425 = pneg %p180
        $region74: #{tpu_custom_call.1} parent=51 // pred_check_branch
          %427 = sbr.rel (%p425) target = $region76
        $region75: #{tpu_custom_call.1} parent=51 // pred_region
          %428 = dma.done [#allocation12], 16
        $region76: #{tpu_custom_call.1} parent=51 // pred_fallthru
          _
        // Predicated region
        $region77: #{tpu_custom_call.1} parent=51 // pred_check
          %p429 = pneg %p201
        $region78: #{tpu_custom_call.1} parent=51 // pred_check_branch
          %431 = sbr.rel (%p429) target = $region80
        $region79: #{tpu_custom_call.1} parent=51 // pred_region
          %432 = dma.done [#allocation12], 2048
        $region80: #{tpu_custom_call.1} parent=51 // pred_fallthru
          _
        // Predicated region
        $region81: #{tpu_custom_call.1} parent=51 // pred_check
          %p433 = pneg %p222
        $region82: #{tpu_custom_call.1} parent=51 // pred_check_branch
          %435 = sbr.rel (%p433) target = $region84
        $region83: #{tpu_custom_call.1} parent=51 // pred_region
          %436 = dma.done [#allocation15], 16
        $region84: #{tpu_custom_call.1} parent=51 // pred_fallthru
          _
        %s437 = sand.u32 %s53, 1
        %s438 = scalar_lea.sflag [#allocation3], %s437
        %s439 = sand.u32 %s53, 1
        %s440 = smul.addr %s439, 16
        %s441 = scalar_lea.vmem [#allocation2], %s440
        %p442 = pneg %p66
        %p443 = pneg %p63
        %s444 = sand.u32 %s31, 1
        %s445 = scalar_lea.sflag [#allocation6], %s444
        %s446 = sand.u32 %s83, 1
        %s447 = smul.addr %s446, 16
        %s448 = scalar_lea.vmem [#allocation5], %s447
        %p449 = pneg %p96
        %p450 = pneg %p93
        %p451 = pneg %p117
        %p452 = pneg %p114
        %p453 = pneg %p138
        %p454 = pneg %p135
        %p455 = pneg %p159
        %p456 = pneg %p156
        %p457 = pneg %p180
        %p458 = pneg %p177
        %p459 = pneg %p201
        %p460 = pneg %p198
        %p461 = pneg %p222
        %p462 = pneg %p219
        %p463 = pneg %p250
        %p464 = pneg %p247
        %s465 = sand.u32 %s237, 1
        %s466 = scalar_lea.sflag [#allocation4], %s465
        %s467 = sand.u32 %s237, 1
        %s468 = smul.addr %s467, 16
        %s469 = scalar_lea.vmem [#allocation16], %s468
        %s470 = smul.u32 2, %s36
        %s471 = sadd.s32 %s36, 1
        %s472 = smul.u32 2, %s471
        %s473 = smul.u32 2, %s36
        %v475 = vld [vmem:[%s399] sm:$0xff]
        %v476 = vld [vmem:[%s399 + $0x8] sm:$0xff]
        %v477 = vld [vmem:[%s408] sm:$0xff]
        %v478 = vld [vmem:[%s408 + $0x8] sm:$0xff]
        %v479 = vld [vmem:[#allocation13] sm:$0xff]
        %v480 = vld [vmem:[#allocation13 + $0x8] sm:$0xff]
        %v481 = vld [vmem:[#allocation13 + $0x10] sm:$0xff]
        %v482 = vld [vmem:[#allocation13 + $0x18] sm:$0xff]
        %v483 = vld [vmem:[#allocation13 + $0x20] sm:$0xff]
        %v484 = vld [vmem:[#allocation13 + $0x28] sm:$0xff]
        %v485 = vld [vmem:[#allocation13 + $0x30] sm:$0xff]
        %v486 = vld [vmem:[#allocation13 + $0x38] sm:$0xff]
        %v487 = vld [vmem:[#allocation13 + $0x40] sm:$0xff]
        %v488 = vld [vmem:[#allocation13 + $0x48] sm:$0xff]
        %v489 = vld [vmem:[#allocation13 + $0x50] sm:$0xff]
        %v490 = vld [vmem:[#allocation13 + $0x58] sm:$0xff]
        %v491 = vld [vmem:[#allocation13 + $0x60] sm:$0xff]
        %v492 = vld [vmem:[#allocation13 + $0x68] sm:$0xff]
        %v493 = vld [vmem:[#allocation13 + $0x70] sm:$0xff]
        %v494 = vld [vmem:[#allocation13 + $0x78] sm:$0xff]
        %v495 = vld [vmem:[#allocation14] sm:$0x1]
        %v497 = vlaneseq
        %v498 = vshrl.u32 %v497, 7
        %v499 = vsub.s32 0, %v498
        %v500 = vrot.slane %v495, %v499
        %vm505 = vcmask 1043456
        %v506 = vrot.slane %v475, 4
        %v507 = vrot.slane %v476, 4
        %v508 = vsel %vm505, %v506, %v507
        %v509 = vrot.slane %v477, 4
        %v510 = vsel %vm505, %v507, %v509
        %513 = vmatprep.subr.mxu0 0.0
        %514 = vmatpush1.msra.mxu0 %v479
        %515 = vmatprep.subr.mxu0 0.0
        %516 = vmatpush1.msra.mxu0 %v480
        %517 = vmatprep.subr.mxu0 0.0
        %518 = vmatpush1.msra.mxu0 %v481
        %519 = vmatprep.subr.mxu0 0.0
        %520 = vmatpush1.msra.mxu0 %v482
        %521 = vmatprep.subr.mxu0 0.0
        %522 = vmatpush1.msra.mxu0 %v483
        %523 = vmatprep.subr.mxu0 0.0
        %524 = vmatpush1.msra.mxu0 %v484
        %525 = vmatprep.subr.mxu0 0.0
        %526 = vmatpush1.msra.mxu0 %v485
        %527 = vmatprep.subr.mxu0 0.0
        %528 = vmatpush1.msra.mxu0 %v486
        %529 = vmatprep.subr.mxu0 0.0
        %530 = vmatpush1.msra.mxu0 %v487
        %531 = vmatprep.subr.mxu0 0.0
        %532 = vmatpush1.msra.mxu0 %v488
        %533 = vmatprep.subr.mxu0 0.0
        %534 = vmatpush1.msra.mxu0 %v489
        %535 = vmatprep.subr.mxu0 0.0
        %536 = vmatpush1.msra.mxu0 %v490
        %537 = vmatprep.subr.mxu0 0.0
        %538 = vmatpush1.msra.mxu0 %v491
        %539 = vmatprep.subr.mxu0 0.0
        %540 = vmatpush1.msra.mxu0 %v492
        %541 = vmatprep.subr.mxu0 0.0
        %542 = vmatpush1.msra.mxu0 %v493
        %543 = vmatprep.subr.mxu0 0.0
        %544 = vmatpush1.msra.mxu0 %v494
        %545 = vmatprep.subr.mxu0 0.0
        %546 = vmatpush1.msra.mxu0 0.0
        %547 = vmatprep.subr.mxu0 0.0
        %548 = vmatpush1.msra.mxu0 0.0
        %549 = vmatprep.subr.mxu0 0.0
        %550 = vmatpush1.msra.mxu0 0.0
        %551 = vmatprep.subr.mxu0 0.0
        %552 = vmatpush1.msra.mxu0 0.0
        %553 = vmatprep.subr.mxu0 0.0
        %554 = vmatpush1.msra.mxu0 0.0
        %555 = vmatprep.subr.mxu0 0.0
        %556 = vmatpush1.msra.mxu0 0.0
        %557 = vmatprep.subr.mxu0 0.0
        %558 = vmatpush1.msra.mxu0 0.0
        %559 = vmatprep.subr.mxu0 0.0
        %560 = vmatpush1.msra.mxu0 0.0
        %561 = vmatprep.subr.mxu0 0.0
        %562 = vmatpush1.msra.mxu0 0.0
        %563 = vmatprep.subr.mxu0 0.0
        %564 = vmatpush1.msra.mxu0 0.0
        %565 = vmatprep.subr.mxu0 0.0
        %566 = vmatpush1.msra.mxu0 0.0
        %567 = vmatprep.subr.mxu0 0.0
        %568 = vmatpush1.msra.mxu0 0.0
        %569 = vmatprep.subr.mxu0 0.0
        %570 = vmatpush1.msra.mxu0 0.0
        %571 = vmatprep.subr.mxu0 0.0
        %572 = vmatpush1.msra.mxu0 0.0
        %573 = vmatprep.subr.mxu0 0.0
        %574 = vmatpush1.msra.mxu0 0.0
        %575 = vmatprep.subr.mxu0 0.0
        %576 = vmatpush1.msra.mxu0 0.0
        %577 = vmatprep.mubr.f32.mxu0 0.0
        %578 = vmatmul.mubr.f32.gmra.mrb[0].mxu0 %v508
        %v579 = vpop.f32.mrb[0].mxu0
        %v580 = vadd.f32 %v500, %v579
        %v581 = vpop.f32.mrb[0].mxu0
        %582 = vmatprep.mubr.f32.mxu0 0.0
        %583 = vmatmul.mubr.f32.gmra.mrb[0].mxu0 %v510
        %v584 = vpop.f32.mrb[0].mxu0
        %v585 = vadd.f32 %v500, %v584
        %v586 = vpop.f32.mrb[0].mxu0
        %587 = vdwg.mxu0
        %v588 = vmul.f32 %v475, 0.5
        %v589 = vmul.f32 %v476, 0.5
        %v590 = vmul.f32 %v477, 0.5
        %v591 = vmul.f32 %v478, 0.5
        %v592 = vmul.f32 %v475, 0.70710677
        %v593 = vmul.f32 %v476, 0.70710677
        %v594 = vmul.f32 %v477, 0.70710677
        %v595 = vmul.f32 %v478, 0.70710677
        %v596 = verf.f32.pop %v592
        %v597 = verf.f32.pop %v593
        %v598 = verf.f32.pop %v594
        %v599 = verf.f32.pop %v595
        %v600 = vadd.f32 %v596, 1.0
        %v601 = vadd.f32 %v597, 1.0
        %v602 = vadd.f32 %v598, 1.0
        %v603 = vadd.f32 %v599, 1.0
        %v604 = vmul.f32 %v588, %v600
        %v605 = vmul.f32 %v589, %v601
        %v606 = vmul.f32 %v590, %v602
        %v607 = vmul.f32 %v591, %v603
        %v608 = vpack.c.bf16 %v605, %v604
        %v609 = vpack.c.bf16 %v607, %v606
        %vm612 = vcmask 1046528
        %v613 = vrot.slane %v608, 1
        %v614 = vrot.slane %v609, 1
        %v615 = vsel %vm612, %v613, %v614
        %vm618 = vcmask 1045504
        %v619 = vrot.slane %v608, 2
        %v620 = vrot.slane %v609, 2
        %v621 = vsel %vm618, %v619, %v620
        %v624 = vld [vmem:[#allocation7] sm:$0xf]
        %v625 = vld [vmem:[#allocation7 + $0x4] sm:$0xf]
        %v626 = vld [vmem:[#allocation7 + $0x8] sm:$0xf]
        %v627 = vld [vmem:[#allocation7 + $0xc] sm:$0xf]
        %v628 = vld [vmem:[#allocation7 + $0x10] sm:$0xf]
        %v629 = vld [vmem:[#allocation7 + $0x14] sm:$0xf]
        %v630 = vld [vmem:[#allocation7 + $0x18] sm:$0xf]
        %v631 = vld [vmem:[#allocation7 + $0x1c] sm:$0xf]
        %v632 = vld [vmem:[#allocation7 + $0x20] sm:$0xf]
        %v633 = vld [vmem:[#allocation7 + $0x24] sm:$0xf]
        %v634 = vld [vmem:[#allocation7 + $0x28] sm:$0xf]
        %v635 = vld [vmem:[#allocation7 + $0x2c] sm:$0xf]
        %v636 = vld [vmem:[#allocation7 + $0x30] sm:$0xf]
        %v637 = vld [vmem:[#allocation7 + $0x34] sm:$0xf]
        %v638 = vld [vmem:[#allocation7 + $0x38] sm:$0xf]
        %v639 = vld [vmem:[#allocation7 + $0x3c] sm:$0xf]
        %v640 = vld [vmem:[#allocation7 + $0x40] sm:$0xf]
        %v641 = vld [vmem:[#allocation7 + $0x44] sm:$0xf]
        %v642 = vld [vmem:[#allocation7 + $0x48] sm:$0xf]
        %v643 = vld [vmem:[#allocation7 + $0x4c] sm:$0xf]
        %v644 = vld [vmem:[#allocation7 + $0x50] sm:$0xf]
        %v645 = vld [vmem:[#allocation7 + $0x54] sm:$0xf]
        %v646 = vld [vmem:[#allocation7 + $0x58] sm:$0xf]
        %v647 = vld [vmem:[#allocation7 + $0x5c] sm:$0xf]
        %v648 = vld [vmem:[#allocation7 + $0x60] sm:$0xf]
        %v649 = vld [vmem:[#allocation7 + $0x64] sm:$0xf]
        %v650 = vld [vmem:[#allocation7 + $0x68] sm:$0xf]
        %v651 = vld [vmem:[#allocation7 + $0x6c] sm:$0xf]
        %v652 = vld [vmem:[#allocation7 + $0x70] sm:$0xf]
        %v653 = vld [vmem:[#allocation7 + $0x74] sm:$0xf]
        %v654 = vld [vmem:[#allocation7 + $0x78] sm:$0xf]
        %v655 = vld [vmem:[#allocation7 + $0x7c] sm:$0xf]
        %v656 = vld [vmem:[#allocation7 + $0x80] sm:$0xf]
        %v657 = vld [vmem:[#allocation7 + $0x84] sm:$0xf]
        %v658 = vld [vmem:[#allocation7 + $0x88] sm:$0xf]
        %v659 = vld [vmem:[#allocation7 + $0x8c] sm:$0xf]
        %v660 = vld [vmem:[#allocation7 + $0x90] sm:$0xf]
        %v661 = vld [vmem:[#allocation7 + $0x94] sm:$0xf]
        %v662 = vld [vmem:[#allocation7 + $0x98] sm:$0xf]
        %v663 = vld [vmem:[#allocation7 + $0x9c] sm:$0xf]
        %v664 = vld [vmem:[#allocation7 + $0xa0] sm:$0xf]
        %v665 = vld [vmem:[#allocation7 + $0xa4] sm:$0xf]
        %v666 = vld [vmem:[#allocation7 + $0xa8] sm:$0xf]
        %v667 = vld [vmem:[#allocation7 + $0xac] sm:$0xf]
        %v668 = vld [vmem:[#allocation7 + $0xb0] sm:$0xf]
        %v669 = vld [vmem:[#allocation7 + $0xb4] sm:$0xf]
        %v670 = vld [vmem:[#allocation7 + $0xb8] sm:$0xf]
        %v671 = vld [vmem:[#allocation7 + $0xbc] sm:$0xf]
        %v672 = vld [vmem:[#allocation8] sm:$0x1]
        %v674 = vlaneseq
        %v675 = vshrl.u32 %v674, 7
        %v676 = vsub.s32 0, %v675
        %v677 = vrot.slane %v672, %v676
        %v727 = vunpack.c.l.b16 %v624
        %v728 = vunpack.c.l.b16 %v625
        %v729 = vunpack.c.l.b16 %v626
        %v730 = vunpack.c.l.b16 %v627
        %v731 = vunpack.c.l.b16 %v628
        %v732 = vunpack.c.l.b16 %v629
        %v733 = vunpack.c.l.b16 %v630
        %v734 = vunpack.c.l.b16 %v631
        %v735 = vunpack.c.l.b16 %v632
        %v736 = vunpack.c.l.b16 %v633
        %v737 = vunpack.c.l.b16 %v634
        %v738 = vunpack.c.l.b16 %v635
        %v739 = vunpack.c.l.b16 %v636
        %v740 = vunpack.c.l.b16 %v637
        %v741 = vunpack.c.l.b16 %v638
        %v742 = vunpack.c.l.b16 %v639
        %v743 = vunpack.c.l.b16 %v640
        %v744 = vunpack.c.l.b16 %v641
        %v745 = vunpack.c.l.b16 %v642
        %v746 = vunpack.c.l.b16 %v643
        %v747 = vunpack.c.l.b16 %v644
        %v748 = vunpack.c.l.b16 %v645
        %v749 = vunpack.c.l.b16 %v646
        %v750 = vunpack.c.l.b16 %v647
        %v751 = vunpack.c.l.b16 %v648
        %v752 = vunpack.c.l.b16 %v649
        %v753 = vunpack.c.l.b16 %v650
        %v754 = vunpack.c.l.b16 %v651
        %v755 = vunpack.c.l.b16 %v652
        %v756 = vunpack.c.l.b16 %v653
        %v757 = vunpack.c.l.b16 %v654
        %v758 = vunpack.c.l.b16 %v655
        %v759 = vunpack.c.l.b16 %v656
        %v760 = vunpack.c.l.b16 %v657
        %v761 = vunpack.c.l.b16 %v658
        %v762 = vunpack.c.l.b16 %v659
        %v763 = vunpack.c.l.b16 %v660
        %v764 = vunpack.c.l.b16 %v661
        %v765 = vunpack.c.l.b16 %v662
        %v766 = vunpack.c.l.b16 %v663
        %v767 = vunpack.c.l.b16 %v664
        %v768 = vunpack.c.l.b16 %v665
        %v769 = vunpack.c.l.b16 %v666
        %v770 = vunpack.c.l.b16 %v667
        %v771 = vunpack.c.l.b16 %v668
        %v772 = vunpack.c.l.b16 %v669
        %v773 = vunpack.c.l.b16 %v670
        %v774 = vunpack.c.l.b16 %v671
        %v775 = vpack.c.b16 %v728, %v727
        %v776 = vpack.c.b16 %v730, %v729
        %v777 = vpack.c.b16 %v732, %v731
        %v778 = vpack.c.b16 %v734, %v733
        %v779 = vpack.c.b16 %v736, %v735
        %v780 = vpack.c.b16 %v738, %v737
        %v781 = vpack.c.b16 %v740, %v739
        %v782 = vpack.c.b16 %v742, %v741
        %v783 = vpack.c.b16 %v744, %v743
        %v784 = vpack.c.b16 %v746, %v745
        %v785 = vpack.c.b16 %v748, %v747
        %v786 = vpack.c.b16 %v750, %v749
        %v787 = vpack.c.b16 %v752, %v751
        %v788 = vpack.c.b16 %v754, %v753
        %v789 = vpack.c.b16 %v756, %v755
        %v790 = vpack.c.b16 %v758, %v757
        %v791 = vpack.c.b16 %v760, %v759
        %v792 = vpack.c.b16 %v762, %v761
        %v793 = vpack.c.b16 %v764, %v763
        %v794 = vpack.c.b16 %v766, %v765
        %v795 = vpack.c.b16 %v768, %v767
        %v796 = vpack.c.b16 %v770, %v769
        %v797 = vpack.c.b16 %v772, %v771
        %v798 = vpack.c.b16 %v774, %v773
        %823 = vmatprep.subr.bf16.mxu0 0
        %824 = vmatpush1.bf16.msra.mxu0 %v775
        %825 = vmatprep.subr.bf16.mxu0 0
        %826 = vmatpush1.bf16.msra.mxu0 %v776
        %827 = vmatprep.subr.bf16.mxu0 0
        %828 = vmatpush1.bf16.msra.mxu0 %v777
        %829 = vmatprep.subr.bf16.mxu0 0
        %830 = vmatpush1.bf16.msra.mxu0 %v778
        %831 = vmatprep.subr.bf16.mxu0 0
        %832 = vmatpush1.bf16.msra.mxu0 %v779
        %833 = vmatprep.subr.bf16.mxu0 0
        %834 = vmatpush1.bf16.msra.mxu0 %v780
        %835 = vmatprep.subr.bf16.mxu0 0
        %836 = vmatpush1.bf16.msra.mxu0 %v781
        %837 = vmatprep.subr.bf16.mxu0 0
        %838 = vmatpush1.bf16.msra.mxu0 %v782
        %839 = vmatprep.subr.bf16.mxu0 0
        %840 = vmatpush1.bf16.msra.mxu0 %v783
        %841 = vmatprep.subr.bf16.mxu0 0
        %842 = vmatpush1.bf16.msra.mxu0 %v784
        %843 = vmatprep.subr.bf16.mxu0 0
        %844 = vmatpush1.bf16.msra.mxu0 %v785
        %845 = vmatprep.subr.bf16.mxu0 0
        %846 = vmatpush1.bf16.msra.mxu0 %v786
        %847 = vmatprep.subr.bf16.mxu0 0
        %848 = vmatpush1.bf16.msra.mxu0 %v787
        %849 = vmatprep.subr.bf16.mxu0 0
        %850 = vmatpush1.bf16.msra.mxu0 %v788
        %851 = vmatprep.subr.bf16.mxu0 0
        %852 = vmatpush1.bf16.msra.mxu0 %v789
        %853 = vmatprep.subr.bf16.mxu0 0
        %854 = vmatpush1.bf16.msra.mxu0 %v790
        %855 = vmatprep.mubr.bf16.mxu0 %v615
        %856 = vmatmul.mubr.bf16.gmra.mrb[0].mxu0 %v608
        %v857 = vpop.f32.mrb[0].mxu0
        %v858 = vadd.f32 %v677, %v857
        %v859 = vpop.f32.mrb[0].mxu0
        %v860 = vpop.f32.mrb[0].mxu0
        %v861 = vadd.f32 %v677, %v860
        %v862 = vpop.f32.mrb[0].mxu0
        %863 = vmatprep.mubr.bf16.mxu0 %v614
        %864 = vmatmul.mubr.bf16.gmra.mrb[0].mxu0 %v609
        %v865 = vpop.f32.mrb[0].mxu0
        %v866 = vadd.f32 %v677, %v865
        %v867 = vpop.f32.mrb[0].mxu0
        %v868 = vpop.f32.mrb[0].mxu0
        %v869 = vpop.f32.mrb[0].mxu0
        %870 = vdwg.mxu0
        %871 = vmatprep.subr.bf16.mxu0 0
        %872 = vmatpush1.bf16.msra.mxu0 %v791
        %873 = vmatprep.subr.bf16.mxu0 0
        %874 = vmatpush1.bf16.msra.mxu0 %v792
        %875 = vmatprep.subr.bf16.mxu0 0
        %876 = vmatpush1.bf16.msra.mxu0 %v793
        %877 = vmatprep.subr.bf16.mxu0 0
        %878 = vmatpush1.bf16.msra.mxu0 %v794
        %879 = vmatprep.subr.bf16.mxu0 0
        %880 = vmatpush1.bf16.msra.mxu0 %v795
        %881 = vmatprep.subr.bf16.mxu0 0
        %882 = vmatpush1.bf16.msra.mxu0 %v796
        %883 = vmatprep.subr.bf16.mxu0 0
        %884 = vmatpush1.bf16.msra.mxu0 %v797
        %885 = vmatprep.subr.bf16.mxu0 0
        %886 = vmatpush1.bf16.msra.mxu0 %v798
        %887 = vmatprep.subr.bf16.mxu0 0
        %888 = vmatpush1.bf16.msra.mxu0 0
        %889 = vmatprep.subr.bf16.mxu0 0
        %890 = vmatpush1.bf16.msra.mxu0 0
        %891 = vmatprep.subr.bf16.mxu0 0
        %892 = vmatpush1.bf16.msra.mxu0 0
        %893 = vmatprep.subr.bf16.mxu0 0
        %894 = vmatpush1.bf16.msra.mxu0 0
        %895 = vmatprep.subr.bf16.mxu0 0
        %896 = vmatpush1.bf16.msra.mxu0 0
        %897 = vmatprep.subr.bf16.mxu0 0
        %898 = vmatpush1.bf16.msra.mxu0 0
        %899 = vmatprep.subr.bf16.mxu0 0
        %900 = vmatpush1.bf16.msra.mxu0 0
        %901 = vmatprep.subr.bf16.mxu0 0
        %902 = vmatpush1.bf16.msra.mxu0 0
        %903 = vmatprep.mubr.bf16.mxu0 0
        %904 = vmatmul.mubr.bf16.gmra.mrb[0].mxu0 %v621
        %v905 = vpop.f32.mrb[0].mxu0
        %v906 = vadd.f32 %v858, %v905
        %v907 = vpop.f32.mrb[0].mxu0
        %v908 = vpop.f32.mrb[0].mxu0
        %v909 = vadd.f32 %v861, %v908
        %v910 = vpop.f32.mrb[0].mxu0
        %911 = vmatprep.mubr.bf16.mxu0 0
        %912 = vmatmul.mubr.bf16.gmra.mrb[0].mxu0 %v620
        %v913 = vpop.f32.mrb[0].mxu0
        %v914 = vadd.f32 %v866, %v913
        %v915 = vpop.f32.mrb[0].mxu0
        %v916 = vpop.f32.mrb[0].mxu0
        %v917 = vpop.f32.mrb[0].mxu0
        %918 = vdwg.mxu0
        %v919 = vmul.f32 %v906, 0.5
        %v920 = vmul.f32 %v909, 0.5
        %v921 = vmul.f32 %v914, 0.5
        %v922 = vmul.f32 %v906, 0.70710677
        %v923 = vmul.f32 %v909, 0.70710677
        %v924 = vmul.f32 %v914, 0.70710677
        %v925 = verf.f32.pop %v922
        %v926 = verf.f32.pop %v923
        %v927 = verf.f32.pop %v924
        %v928 = vadd.f32 %v925, 1.0
        %v929 = vadd.f32 %v926, 1.0
        %v930 = vadd.f32 %v927, 1.0
        %v931 = vmul.f32 %v919, %v928
        %v932 = vmul.f32 %v920, %v929
        %v933 = vmul.f32 %v921, %v930
        %s934 = smul.u32 %s36, 16
        %s935 = ssub.s32 %s934, 2
        %v936 = vlaneseq
        %v937 = vshrl.u32 %v936, 7
        %v938 = vadd.s32 %v937, 8
        %v939 = vadd.s32 %v937, 16
        %v940 = vstv %s935
        %v941 = vadd.s32 %v940, %v937
        %v942 = vadd.s32 %v940, %v938
        %v943 = vadd.s32 %v940, %v939
        %vm944 = vcmp.ge.s32.totalorder %v941, 0
        %vm945 = vcmp.ge.s32.totalorder %v942, 0
        %vm946 = vcmp.ge.s32.totalorder %v943, 0
        %vm947 = vcmp.lt.s32.totalorder %v941, 16
        %vm948 = vcmp.lt.s32.totalorder %v942, 16
        %vm949 = vcmp.lt.s32.totalorder %v943, 16
        %vm950 = vmand %vm944, %vm947
        %vm951 = vmand %vm945, %vm948
        %vm952 = vmand %vm946, %vm949
        %v953 = vsel %vm950, 1, 0
        %v954 = vsel %vm951, 1, 0
        %v955 = vsel %vm952, 1, 0
        %vm956 = vcmp.eq.s32.totalorder %v953, 1
        %vm957 = vcmp.eq.s32.totalorder %v954, 1
        %vm958 = vcmp.eq.s32.totalorder %v955, 1
        %v959 = vsel %vm956, %v931, 0.0
        %v960 = vsel %vm957, %v932, 0.0
        %v961 = vsel %vm958, %v933, 0.0
        %v962 = vpack.c.bf16 %v960, %v959
        %v963 = vpack.c.bf16 %v961, %v961
        %v966 = vrot.slane %v962, 1
        %v967 = vrot.slane %v963, 1
        %v968 = vsel %vm612, %v966, %v967
        %v970 = vrot.slane %v962, 2
        %v971 = vrot.slane %v963, 2
        %v972 = vsel %vm618, %v970, %v971
        %v974 = vld [vmem:[#allocation10] sm:$0xf]
        %v975 = vld [vmem:[#allocation10 + $0x4] sm:$0xf]
        %v976 = vld [vmem:[#allocation10 + $0x8] sm:$0xf]
        %v977 = vld [vmem:[#allocation10 + $0xc] sm:$0xf]
        %v978 = vld [vmem:[#allocation10 + $0x10] sm:$0xf]
        %v979 = vld [vmem:[#allocation10 + $0x14] sm:$0xf]
        %v980 = vld [vmem:[#allocation10 + $0x18] sm:$0xf]
        %v981 = vld [vmem:[#allocation10 + $0x1c] sm:$0xf]
        %v982 = vld [vmem:[#allocation10 + $0x20] sm:$0xf]
        %v983 = vld [vmem:[#allocation10 + $0x24] sm:$0xf]
        %v984 = vld [vmem:[#allocation10 + $0x28] sm:$0xf]
        %v985 = vld [vmem:[#allocation10 + $0x2c] sm:$0xf]
        %v986 = vld [vmem:[#allocation10 + $0x30] sm:$0xf]
        %v987 = vld [vmem:[#allocation10 + $0x34] sm:$0xf]
        %v988 = vld [vmem:[#allocation10 + $0x38] sm:$0xf]
        %v989 = vld [vmem:[#allocation10 + $0x3c] sm:$0xf]
        %v990 = vld [vmem:[#allocation10 + $0x40] sm:$0xf]
        %v991 = vld [vmem:[#allocation10 + $0x44] sm:$0xf]
        %v992 = vld [vmem:[#allocation10 + $0x48] sm:$0xf]
        %v993 = vld [vmem:[#allocation10 + $0x4c] sm:$0xf]
        %v994 = vld [vmem:[#allocation10 + $0x50] sm:$0xf]
        %v995 = vld [vmem:[#allocation10 + $0x54] sm:$0xf]
        %v996 = vld [vmem:[#allocation10 + $0x58] sm:$0xf]
        %v997 = vld [vmem:[#allocation10 + $0x5c] sm:$0xf]
        %v998 = vld [vmem:[#allocation10 + $0x60] sm:$0xf]
        %v999 = vld [vmem:[#allocation10 + $0x64] sm:$0xf]
        %v1000 = vld [vmem:[#allocation10 + $0x68] sm:$0xf]
        %v1001 = vld [vmem:[#allocation10 + $0x6c] sm:$0xf]
        %v1002 = vld [vmem:[#allocation10 + $0x70] sm:$0xf]
        %v1003 = vld [vmem:[#allocation10 + $0x74] sm:$0xf]
        %v1004 = vld [vmem:[#allocation10 + $0x78] sm:$0xf]
        %v1005 = vld [vmem:[#allocation10 + $0x7c] sm:$0xf]
        %v1006 = vld [vmem:[#allocation10 + $0x80] sm:$0xf]
        %v1007 = vld [vmem:[#allocation10 + $0x84] sm:$0xf]
        %v1008 = vld [vmem:[#allocation10 + $0x88] sm:$0xf]
        %v1009 = vld [vmem:[#allocation10 + $0x8c] sm:$0xf]
        %v1010 = vld [vmem:[#allocation10 + $0x90] sm:$0xf]
        %v1011 = vld [vmem:[#allocation10 + $0x94] sm:$0xf]
        %v1012 = vld [vmem:[#allocation10 + $0x98] sm:$0xf]
        %v1013 = vld [vmem:[#allocation10 + $0x9c] sm:$0xf]
        %v1014 = vld [vmem:[#allocation10 + $0xa0] sm:$0xf]
        %v1015 = vld [vmem:[#allocation10 + $0xa4] sm:$0xf]
        %v1016 = vld [vmem:[#allocation10 + $0xa8] sm:$0xf]
        %v1017 = vld [vmem:[#allocation10 + $0xac] sm:$0xf]
        %v1018 = vld [vmem:[#allocation10 + $0xb0] sm:$0xf]
        %v1019 = vld [vmem:[#allocation10 + $0xb4] sm:$0xf]
        %v1020 = vld [vmem:[#allocation10 + $0xb8] sm:$0xf]
        %v1021 = vld [vmem:[#allocation10 + $0xbc] sm:$0xf]
        %v1022 = vld [vmem:[#allocation11] sm:$0x1]
        %v1024 = vlaneseq
        %v1025 = vshrl.u32 %v1024, 7
        %v1026 = vsub.s32 0, %v1025
        %v1027 = vrot.slane %v1022, %v1026
        %v1077 = vunpack.c.l.b16 %v974
        %v1078 = vunpack.c.l.b16 %v975
        %v1079 = vunpack.c.l.b16 %v976
        %v1080 = vunpack.c.l.b16 %v977
        %v1081 = vunpack.c.l.b16 %v978
        %v1082 = vunpack.c.l.b16 %v979
        %v1083 = vunpack.c.l.b16 %v980
        %v1084 = vunpack.c.l.b16 %v981
        %v1085 = vunpack.c.l.b16 %v982
        %v1086 = vunpack.c.l.b16 %v983
        %v1087 = vunpack.c.l.b16 %v984
        %v1088 = vunpack.c.l.b16 %v985
        %v1089 = vunpack.c.l.b16 %v986
        %v1090 = vunpack.c.l.b16 %v987
        %v1091 = vunpack.c.l.b16 %v988
        %v1092 = vunpack.c.l.b16 %v989
        %v1093 = vunpack.c.l.b16 %v990
        %v1094 = vunpack.c.l.b16 %v991
        %v1095 = vunpack.c.l.b16 %v992
        %v1096 = vunpack.c.l.b16 %v993
        %v1097 = vunpack.c.l.b16 %v994
        %v1098 = vunpack.c.l.b16 %v995
        %v1099 = vunpack.c.l.b16 %v996
        %v1100 = vunpack.c.l.b16 %v997
        %v1101 = vunpack.c.l.b16 %v998
        %v1102 = vunpack.c.l.b16 %v999
        %v1103 = vunpack.c.l.b16 %v1000
        %v1104 = vunpack.c.l.b16 %v1001
        %v1105 = vunpack.c.l.b16 %v1002
        %v1106 = vunpack.c.l.b16 %v1003
        %v1107 = vunpack.c.l.b16 %v1004
        %v1108 = vunpack.c.l.b16 %v1005
        %v1109 = vunpack.c.l.b16 %v1006
        %v1110 = vunpack.c.l.b16 %v1007
        %v1111 = vunpack.c.l.b16 %v1008
        %v1112 = vunpack.c.l.b16 %v1009
        %v1113 = vunpack.c.l.b16 %v1010
        %v1114 = vunpack.c.l.b16 %v1011
        %v1115 = vunpack.c.l.b16 %v1012
        %v1116 = vunpack.c.l.b16 %v1013
        %v1117 = vunpack.c.l.b16 %v1014
        %v1118 = vunpack.c.l.b16 %v1015
        %v1119 = vunpack.c.l.b16 %v1016
        %v1120 = vunpack.c.l.b16 %v1017
        %v1121 = vunpack.c.l.b16 %v1018
        %v1122 = vunpack.c.l.b16 %v1019
        %v1123 = vunpack.c.l.b16 %v1020
        %v1124 = vunpack.c.l.b16 %v1021
        %v1125 = vpack.c.b16 %v1078, %v1077
        %v1126 = vpack.c.b16 %v1080, %v1079
        %v1127 = vpack.c.b16 %v1082, %v1081
        %v1128 = vpack.c.b16 %v1084, %v1083
        %v1129 = vpack.c.b16 %v1086, %v1085
        %v1130 = vpack.c.b16 %v1088, %v1087
        %v1131 = vpack.c.b16 %v1090, %v1089
        %v1132 = vpack.c.b16 %v1092, %v1091
        %v1133 = vpack.c.b16 %v1094, %v1093
        %v1134 = vpack.c.b16 %v1096, %v1095
        %v1135 = vpack.c.b16 %v1098, %v1097
        %v1136 = vpack.c.b16 %v1100, %v1099
        %v1137 = vpack.c.b16 %v1102, %v1101
        %v1138 = vpack.c.b16 %v1104, %v1103
        %v1139 = vpack.c.b16 %v1106, %v1105
        %v1140 = vpack.c.b16 %v1108, %v1107
        %v1141 = vpack.c.b16 %v1110, %v1109
        %v1142 = vpack.c.b16 %v1112, %v1111
        %v1143 = vpack.c.b16 %v1114, %v1113
        %v1144 = vpack.c.b16 %v1116, %v1115
        %v1145 = vpack.c.b16 %v1118, %v1117
        %v1146 = vpack.c.b16 %v1120, %v1119
        %v1147 = vpack.c.b16 %v1122, %v1121
        %v1148 = vpack.c.b16 %v1124, %v1123
        %1173 = vmatprep.subr.bf16.mxu0 0
        %1174 = vmatpush1.bf16.msra.mxu0 %v1125
        %1175 = vmatprep.subr.bf16.mxu0 0
        %1176 = vmatpush1.bf16.msra.mxu0 %v1126
        %1177 = vmatprep.subr.bf16.mxu0 0
        %1178 = vmatpush1.bf16.msra.mxu0 %v1127
        %1179 = vmatprep.subr.bf16.mxu0 0
        %1180 = vmatpush1.bf16.msra.mxu0 %v1128
        %1181 = vmatprep.subr.bf16.mxu0 0
        %1182 = vmatpush1.bf16.msra.mxu0 %v1129
        %1183 = vmatprep.subr.bf16.mxu0 0
        %1184 = vmatpush1.bf16.msra.mxu0 %v1130
        %1185 = vmatprep.subr.bf16.mxu0 0
        %1186 = vmatpush1.bf16.msra.mxu0 %v1131
        %1187 = vmatprep.subr.bf16.mxu0 0
        %1188 = vmatpush1.bf16.msra.mxu0 %v1132
        %1189 = vmatprep.subr.bf16.mxu0 0
        %1190 = vmatpush1.bf16.msra.mxu0 %v1133
        %1191 = vmatprep.subr.bf16.mxu0 0
        %1192 = vmatpush1.bf16.msra.mxu0 %v1134
        %1193 = vmatprep.subr.bf16.mxu0 0
        %1194 = vmatpush1.bf16.msra.mxu0 %v1135
        %1195 = vmatprep.subr.bf16.mxu0 0
        %1196 = vmatpush1.bf16.msra.mxu0 %v1136
        %1197 = vmatprep.subr.bf16.mxu0 0
        %1198 = vmatpush1.bf16.msra.mxu0 %v1137
        %1199 = vmatprep.subr.bf16.mxu0 0
        %1200 = vmatpush1.bf16.msra.mxu0 %v1138
        %1201 = vmatprep.subr.bf16.mxu0 0
        %1202 = vmatpush1.bf16.msra.mxu0 %v1139
        %1203 = vmatprep.subr.bf16.mxu0 0
        %1204 = vmatpush1.bf16.msra.mxu0 %v1140
        %1205 = vmatprep.mubr.bf16.mxu0 %v968
        %1206 = vmatmul.mubr.bf16.gmra.mrb[0].mxu0 %v962
        %v1207 = vpop.f32.mrb[0].mxu0
        %v1208 = vadd.f32 %v1027, %v1207
        %v1209 = vpop.f32.mrb[0].mxu0
        %v1210 = vpop.f32.mrb[0].mxu0
        %v1211 = vadd.f32 %v1027, %v1210
        %v1212 = vpop.f32.mrb[0].mxu0
        %1213 = vdwg.mxu0
        %1214 = vmatprep.subr.bf16.mxu0 0
        %1215 = vmatpush1.bf16.msra.mxu0 %v1141
        %1216 = vmatprep.subr.bf16.mxu0 0
        %1217 = vmatpush1.bf16.msra.mxu0 %v1142
        %1218 = vmatprep.subr.bf16.mxu0 0
        %1219 = vmatpush1.bf16.msra.mxu0 %v1143
        %1220 = vmatprep.subr.bf16.mxu0 0
        %1221 = vmatpush1.bf16.msra.mxu0 %v1144
        %1222 = vmatprep.subr.bf16.mxu0 0
        %1223 = vmatpush1.bf16.msra.mxu0 %v1145
        %1224 = vmatprep.subr.bf16.mxu0 0
        %1225 = vmatpush1.bf16.msra.mxu0 %v1146
        %1226 = vmatprep.subr.bf16.mxu0 0
        %1227 = vmatpush1.bf16.msra.mxu0 %v1147
        %1228 = vmatprep.subr.bf16.mxu0 0
        %1229 = vmatpush1.bf16.msra.mxu0 %v1148
        %1230 = vmatprep.subr.bf16.mxu0 0
        %1231 = vmatpush1.bf16.msra.mxu0 0
        %1232 = vmatprep.subr.bf16.mxu0 0
        %1233 = vmatpush1.bf16.msra.mxu0 0
        %1234 = vmatprep.subr.bf16.mxu0 0
        %1235 = vmatpush1.bf16.msra.mxu0 0
        %1236 = vmatprep.subr.bf16.mxu0 0
        %1237 = vmatpush1.bf16.msra.mxu0 0
        %1238 = vmatprep.subr.bf16.mxu0 0
        %1239 = vmatpush1.bf16.msra.mxu0 0
        %1240 = vmatprep.subr.bf16.mxu0 0
        %1241 = vmatpush1.bf16.msra.mxu0 0
        %1242 = vmatprep.subr.bf16.mxu0 0
        %1243 = vmatpush1.bf16.msra.mxu0 0
        %1244 = vmatprep.subr.bf16.mxu0 0
        %1245 = vmatpush1.bf16.msra.mxu0 0
        %1246 = vmatprep.mubr.bf16.mxu0 0
        %1247 = vmatmul.mubr.bf16.gmra.mrb[0].mxu0 %v972
        %v1248 = vpop.f32.mrb[0].mxu0
        %v1249 = vadd.f32 %v1208, %v1248
        %v1250 = vpop.f32.mrb[0].mxu0
        %v1251 = vpop.f32.mrb[0].mxu0
        %v1252 = vadd.f32 %v1211, %v1251
        %v1253 = vpop.f32.mrb[0].mxu0
        %1254 = vdwg.mxu0
        %v1255 = vadd.f32 %v1249, %v580
        %v1256 = vadd.f32 %v1252, %v585
        %1257 = vst [vmem:[%s469] sm:$0xff] %v1255
        %1258 = vst [vmem:[%s469 + $0x8] sm:$0xff] %v1256
        %s1259 = sand.u32 %s237, 1
        %s1260 = scalar_lea.sflag [#allocation4], %s1259
        %s1261 = sand.u32 %s237, 1
        %s1262 = smul.addr %s1261, 16
        %s1263 = scalar_lea.vmem [#allocation16], %s1262
        // Predicated region
        $region85: #{tpu_custom_call.1} parent=51 // pred_check
          %p1264 = pneg %p247
        $region86: #{tpu_custom_call.1} parent=51 // pred_check_branch
          %1266 = sbr.rel (%p1264) target = $region88
        $region87: #{tpu_custom_call.1} parent=51 // pred_region
          %s1267 = smul.u32 2, %s36
          %s1269 = ssub.s32 256, 256
          %1270 = vsyncadd %s1260, %s1269
          %s1271 = smul.addr %s35, 2
          %s1272 = sadd.s32 %s1267, %s1271
          %s1273 = smul.addr %s1272, 128
          %s1274 = scalar_lea.hbm %s8, %s1273
          %s1275 = sshll.u32 %s1263, 4
          %s1276 = int_to_ptr.vmem [resolvable:$true] %s1275
          %1281 = dma.vmem_to_hbm [thread:$0]  %s1276, 256, %s1274, %s1260, 128, 128, 8
        $region88: #{tpu_custom_call.1} parent=51 // pred_fallthru
          _
      $region52: #{tpu_custom_call.1} parent=5 // pred_fallthru
        _
      %p1282 = scmp.le.s32.totalorder 2, %s26
      // Predicated region
      $region89: #{tpu_custom_call.1} parent=5 // pred_check
        %p1283 = pneg %p1282
      $region90: #{tpu_custom_call.1} parent=5 // pred_check_branch
        %1285 = sbr.rel (%p1283) target = $region92
      $region91: #{tpu_custom_call.1} parent=5 // pred_region
        %s1286 = ssub.s32 %s26, 2
        // Predicated region
        $region93: #{tpu_custom_call.1} parent=91 // pred_check
          %p1287 = pneg %p253
        $region94: #{tpu_custom_call.1} parent=91 // pred_check_branch
          %1289 = sbr.rel (%p1287) target = $region96
        $region95: #{tpu_custom_call.1} parent=91 // pred_region
          %s1290 = sand.u32 %s238, 1
          %s1291 = scalar_lea.sflag [#allocation4], %s1290
          %s1292 = sand.u32 %s238, 1
          %s1293 = smul.addr %s1292, 16
          %s1294 = scalar_lea.vmem [#allocation16], %s1293
          %1295 = dma.done %s1291, 256
        $region96: #{tpu_custom_call.1} parent=91 // pred_fallthru
          _
      $region92: #{tpu_custom_call.1} parent=5 // pred_fallthru
        _
    $region6: #{tpu_custom_call.1} parent=1 // loop_footer
      %s30 = sadd.s32 1, %s26
    $region7: #{tpu_custom_call.1} parent=1 // loop_footer_branch
      %25 = sbr.rel target = $region3
    $region8: #{tpu_custom_call.1} parent=1 // loop_exit
      _
    %1296 = vsyncpa [#allocation3], 1
    %s1297 = scalar_lea.sflag [#allocation3], 1
    %1298 = vsyncpa %s1297, 1
    %1299 = vsyncpa [#allocation6], 1
    %s1300 = scalar_lea.sflag [#allocation6], 1
    %1301 = vsyncpa %s1300, 1
    %1302 = vsyncpa [#allocation9], 1
    %1303 = vsyncpa [#allocation12], 1
    %1304 = vsyncpa [#allocation15], 1
    %1305 = vsyncpa [#allocation4], 1
    %s1306 = scalar_lea.sflag [#allocation4], 1
    %1307 = vsyncpa %s1306, 1

</llo_original>
